<compile_context>
chip_gen: v6e
topology: v6e:2x2x1
jax: 0.10.0
libtpu: 0.0.40
codegen_flags: <defaults>
</compile_context>

<pallas_src>
import math

import jax
import jax.numpy as jnp
import numpy as np
from jax.experimental import pallas as pl
from jax.experimental.pallas import tpu as pltpu


def _round_up(x: int, m: int) -> int:
    return (x + m - 1) // m * m


# --------------------------------------------------------------------------- kernel


def actor_critic_kernel(
    state_ref,                 # [TB, S]      (f32)
    w1_ref, b1_ref,            # [S, H],  [1, H]
    w2_ref, b2_ref,            # [H, H],  [1, H]
    w3_ref, b3_ref,            # [H, H],  [1, H]
    wh1_ref, bh1_ref,          # fused actor|critic head L1: [H, 2*half], [1, 2*half]
    wh2_ref, bh2_ref,          # fused block-diag head L2 (lane-padded): [2*half, P], [1, P]
    out_ref,                   # [TB, P] lane-dense slab; logits in [:, :A], value in [:, A]
):
    cdt = w1_ref.dtype  # MXU operand dtype (bf16); accumulation stays f32.
    x = state_ref[...].astype(cdt)

    # ---- shared trunk: 3 x (Linear + ReLU), f32 accumulation / f32 elementwise ----
    h = jnp.dot(x, w1_ref[...], preferred_element_type=jnp.float32) + b1_ref[...]
    h = jnp.maximum(h, 0.0)
    h = jnp.dot(h.astype(cdt), w2_ref[...], preferred_element_type=jnp.float32) + b2_ref[...]
    h = jnp.maximum(h, 0.0)
    h = jnp.dot(h.astype(cdt), w3_ref[...], preferred_element_type=jnp.float32) + b3_ref[...]
    h = jnp.maximum(h, 0.0)

    # ---- fused actor + critic heads, layer 1 (column-concatenated) ----
    g = jnp.dot(h.astype(cdt), wh1_ref[...], preferred_element_type=jnp.float32) + bh1_ref[...]
    g = jnp.maximum(g, 0.0)

    # ---- fused, lane-dense head layer 2 (single 128-wide store) ----
    out = jnp.dot(g.astype(cdt), wh2_ref[...], preferred_element_type=jnp.float32) + bh2_ref[...]
    out_ref[...] = out.astype(out_ref.dtype)


# --------------------------------------------------------------------------- specs


def _batch_tiled_spec(block_shape):
    """Batch-tiled 2-D block: tile index along batch, full extent along features."""
    return pl.BlockSpec(block_shape, lambda i: (i, 0))


def _resident_spec(arr, *, single_buffer: bool = False):
    """Full-extent block with constant index_map -> VMEM-resident across tiles."""
    nd = arr.ndim
    idx = lambda i, _nd=nd: (0,) * _nd
    if single_buffer:
        # Constant-index blocks are never re-DMA'd; drop the dead second buffer
        # when hidden_dim is large enough for weight VMEM to matter.
        return pl.BlockSpec(arr.shape, idx, pipeline_mode=pl.Buffered(1))
    return pl.BlockSpec(arr.shape, idx)


# --------------------------------------------------------------------------- one-time head fusion


def prepare_fused_params(params):
    """One-time layout plumbing (call at init, NOT per forward).

    Fuses the actor/critic head L1 weights column-wise and packs the two skinny
    L2 layers block-diagonally into a single lane-dense [2*half, 128k] matrix.
    """
    half = params["wa1"].shape[1]
    A = params["wa2"].shape[1]
    wdt = params["w1"].dtype
    out_pad = _round_up(A + 1, 128)

    wh1 = jnp.concatenate([params["wa1"], params["wc1"]], axis=1)          # [H, 2*half]
    bh1 = jnp.concatenate([params["ba1"], params["bc1"]], axis=1)          # [1, 2*half]

    wh2 = jnp.zeros((2 * half, out_pad), wdt)
    wh2 = wh2.at[:half, :A].set(params["wa2"])                             # actor block
    wh2 = wh2.at[half:, A].set(params["wc2"][:, 0])                        # critic column
    bh2 = jnp.zeros((1, out_pad), jnp.float32)
    bh2 = bh2.at[:, :A].set(params["ba2"])
    bh2 = bh2.at[:, A].set(params["bc2"][:, 0])

    fused = {
        "w1": params["w1"], "b1": params["b1"],
        "w2": params["w2"], "b2": params["b2"],
        "w3": params["w3"], "b3": params["b3"],
        "wh1": wh1, "bh1": bh1, "wh2": wh2, "bh2": bh2,
    }
    fused = jax.block_until_ready(fused)   # materialize the packing once, up front
    fused["action_dim"] = int(A)           # static metadata for the wrapper
    return fused


# --------------------------------------------------------------------------- forward


def actor_critic_forward(state, fused, *, block_b: int = 1024,
                         out_dtype=jnp.bfloat16, single_buffer_weights: bool = False):
    """Fused forward. state: [B, state_dim] f32 -> (logits [B, A] f32, value [B, 1] f32)."""
    B, S = state.shape
    A = fused["action_dim"]
    H = fused["w1"].shape[1]
    H2 = fused["wh1"].shape[1]
    out_pad = fused["wh2"].shape[1]

    # --- batch tile: as large as possible, sublane-aligned, >=2 tiles for v7x ---
    tb = min(block_b, _round_up(B, 8))
    if B >= 16:  # enough rows for two 8-row tiles -> let the "parallel" axis use both v7x TCs
        tb = min(tb, _round_up(pl.cdiv(B, 2), 8))
    tb = _round_up(tb, 8)
    b_pad = _round_up(B, tb)
    if b_pad != B:
        state = jnp.pad(state, ((0, b_pad - B), (0, 0)))
    grid = (b_pad // tb,)

    weight_inputs = (
        fused["w1"], fused["b1"],
        fused["w2"], fused["b2"],
        fused["w3"], fused["b3"],
        fused["wh1"], fused["bh1"], fused["wh2"], fused["bh2"],
    )

    in_specs = [_batch_tiled_spec((tb, S))]
    in_specs += [_resident_spec(w, single_buffer=single_buffer_weights) for w in weight_inputs]
    out_specs = _batch_tiled_spec((tb, out_pad))
    out_shape = jax.ShapeDtypeStruct((b_pad, out_pad), out_dtype)

    # --- scheduling / VMEM hints ---
    out_itemsize = np.dtype(out_dtype).itemsize
    weight_bytes = sum(int(w.size) * w.dtype.itemsize for w in weight_inputs)
    flops = 2 * b_pad * (S * H + 2 * H * H + H * H2 + H2 * out_pad)
    bytes_accessed = (b_pad * S * state.dtype.itemsize
                      + b_pad * out_pad * out_itemsize
                      + weight_bytes)
    cost = pl.CostEstimate(flops=flops, transcendentals=0, bytes_accessed=bytes_accessed)

    weight_buffers = 1 if single_buffer_weights else 2
    tile_bytes = 2 * tb * (S * state.dtype.itemsize + out_pad * out_itemsize)  # dbl-buffered I/O tiles
    vmem_needed = weight_buffers * weight_bytes + tile_bytes
    # Raise the default scoped limit (16/32 MiB) but never exceed v7x physical 64 MiB.
    vmem_limit = int(min(64 << 20, max(32 << 20, 2 * vmem_needed)))

    out = pl.pallas_call(
        actor_critic_kernel,
        grid=grid,
        in_specs=in_specs,
        out_specs=out_specs,
        out_shape=out_shape,
        cost_estimate=cost,
        compiler_params=pltpu.CompilerParams(
            dimension_semantics=("parallel",),
            vmem_limit_bytes=vmem_limit,
        ),
    )(state, *weight_inputs)

    out = out[:B]
    logits = out[:, :A].astype(jnp.float32)
    value = out[:, A:A + 1].astype(jnp.float32)
    return logits, value


# --------------------------------------------------------------------------- params / reference


def xavier_uniform(key, fan_in, fan_out, dtype):
    bound = math.sqrt(6.0 / (fan_in + fan_out))
    w = jax.random.uniform(key, (fan_in, fan_out), dtype=jnp.float32,
                           minval=-bound, maxval=bound)
    return w.astype(dtype)


def init_params(key, state_dim, action_dim, hidden_dim=256, weight_dtype=jnp.bfloat16):
    """Weights [in, out] (y = x @ W + b). Weights bf16 (MXU operands), biases f32."""
    half = hidden_dim // 2
    ks = jax.random.split(key, 7)
    return {
        "w1": xavier_uniform(ks[0], state_dim, hidden_dim, weight_dtype),
        "b1": jnp.zeros((1, hidden_dim), jnp.float32),
        "w2": xavier_uniform(ks[1], hidden_dim, hidden_dim, weight_dtype),
        "b2": jnp.zeros((1, hidden_dim), jnp.float32),
        "w3": xavier_uniform(ks[2], hidden_dim, hidden_dim, weight_dtype),
        "b3": jnp.zeros((1, hidden_dim), jnp.float32),
        "wa1": xavier_uniform(ks[3], hidden_dim, half, weight_dtype),
        "ba1": jnp.zeros((1, half), jnp.float32),
        "wa2": xavier_uniform(ks[4], half, action_dim, weight_dtype),
        "ba2": jnp.zeros((1, action_dim), jnp.float32),
        "wc1": xavier_uniform(ks[5], hidden_dim, half, weight_dtype),
        "bc1": jnp.zeros((1, half), jnp.float32),
        "wc2": xavier_uniform(ks[6], half, 1, weight_dtype),
        "bc2": jnp.zeros((1, 1), jnp.float32),
    }


def reference_forward(state, p):
    """Pure-JAX reference (bf16 weight operands, f32 accumulation, f32 outputs)."""
    cdt = p["w1"].dtype

    def lin(x, w, b):
        return jnp.dot(x.astype(cdt), w, preferred_element_type=jnp.float32) + b

    h = jnp.maximum(lin(state, p["w1"], p["b1"]), 0.0)
    h = jnp.maximum(lin(h, p["w2"], p["b2"]), 0.0)
    h = jnp.maximum(lin(h, p["w3"], p["b3"]), 0.0)
    a = jnp.maximum(lin(h, p["wa1"], p["ba1"]), 0.0)
    logits = lin(a, p["wa2"], p["ba2"])
    c = jnp.maximum(lin(h, p["wc1"], p["bc1"]), 0.0)
    value = lin(c, p["wc2"], p["bc2"])
    return logits, value


# --------------------------------------------------------------------------- demo


if __name__ == "__main__":
    # Small shapes consistent with the module (swimmer-like state/action dims).
    batch = 8
    state_dim = 16
    action_dim = 4
    hidden_dim = 32

    key = jax.random.PRNGKey(0)
    k_state, k_params = jax.random.split(key)

    state = jax.random.normal(k_state, (batch, state_dim), dtype=jnp.float32)
    params = init_params(k_params, state_dim, action_dim, hidden_dim)

    # One-time head fusion, hoisted out of the per-forward hot path.
    fused = prepare_fused_params(params)

    logits, value = actor_critic_forward(state, fused)
    logits, value = jax.block_until_ready((logits, value))

    ref_logits, ref_value = reference_forward(state, params)
    assert logits.shape == (batch, action_dim)
    assert value.shape == (batch, 1)
    # Output slab is bf16 -> compare at bf16-level tolerance.
    assert jnp.allclose(logits, ref_logits, atol=2e-2, rtol=2e-2)
    assert jnp.allclose(value, ref_value, atol=2e-2, rtol=2e-2)

    print("KERNEL_OK")
</pallas_src>

<mosaic_0001>
module attributes {stable_mosaic.version = 11 : i64} {
  func.func @actor_critic_kernel(%arg0: i32, %arg1: memref<8x16xf32, #tpu.memory_space<vmem>>, %arg2: memref<16x32xbf16, #tpu.memory_space<vmem>>, %arg3: memref<1x32xf32, #tpu.memory_space<vmem>>, %arg4: memref<32x32xbf16, #tpu.memory_space<vmem>>, %arg5: memref<1x32xf32, #tpu.memory_space<vmem>>, %arg6: memref<32x32xbf16, #tpu.memory_space<vmem>>, %arg7: memref<1x32xf32, #tpu.memory_space<vmem>>, %arg8: memref<32x32xbf16, #tpu.memory_space<vmem>>, %arg9: memref<1x32xf32, #tpu.memory_space<vmem>>, %arg10: memref<32x128xbf16, #tpu.memory_space<vmem>>, %arg11: memref<1x128xf32, #tpu.memory_space<vmem>>, %arg12: memref<8x128xbf16, #tpu.memory_space<vmem>>) attributes {dimension_semantics = [#tpu.dimension_semantics<parallel>], iteration_bounds = array<i64: 1>, scalar_prefetch = 0 : i64, scratch_operands = 0 : i64, tpu.core_type = #tpu.core_type<tc>, window_params = [{transform_indices = @transform_0, window_bounds = array<i64: 8, 16>}, {pipeline_mode = #tpu.pipeline_mode<synchronous>, transform_indices = @transform_1, window_bounds = array<i64: 16, 32>}, {pipeline_mode = #tpu.pipeline_mode<synchronous>, transform_indices = @transform_2, window_bounds = array<i64: 1, 32>}, {pipeline_mode = #tpu.pipeline_mode<synchronous>, transform_indices = @transform_3, window_bounds = array<i64: 32, 32>}, {pipeline_mode = #tpu.pipeline_mode<synchronous>, transform_indices = @transform_4, window_bounds = array<i64: 1, 32>}, {pipeline_mode = #tpu.pipeline_mode<synchronous>, transform_indices = @transform_5, window_bounds = array<i64: 32, 32>}, {pipeline_mode = #tpu.pipeline_mode<synchronous>, transform_indices = @transform_6, window_bounds = array<i64: 1, 32>}, {pipeline_mode = #tpu.pipeline_mode<synchronous>, transform_indices = @transform_7, window_bounds = array<i64: 32, 32>}, {pipeline_mode = #tpu.pipeline_mode<synchronous>, transform_indices = @transform_8, window_bounds = array<i64: 1, 32>}, {pipeline_mode = #tpu.pipeline_mode<synchronous>, transform_indices = @transform_9, window_bounds = array<i64: 32, 128>}, {pipeline_mode = #tpu.pipeline_mode<synchronous>, transform_indices = @transform_10, window_bounds = array<i64: 1, 128>}, {transform_indices = @transform_11, window_bounds = array<i64: 8, 128>}]} {
    %c0 = arith.constant 0 : index
    %c0_0 = arith.constant 0 : index
    %0 = vector.load %arg1[%c0, %c0_0] : memref<8x16xf32, #tpu.memory_space<vmem>>, vector<8x16xf32>
    %1 = arith.truncf %0 : vector<8x16xf32> to vector<8x16xbf16>
    %c0_1 = arith.constant 0 : index
    %c0_2 = arith.constant 0 : index
    %2 = vector.load %arg2[%c0_1, %c0_2] : memref<16x32xbf16, #tpu.memory_space<vmem>>, vector<16x32xbf16>
    %cst = arith.constant dense<0.000000e+00> : vector<8x32xf32>
    %3 = tpu.matmul %1, %2, %cst {dimension_numbers = #tpu.dot_dimension_numbers<[1], [0], [0], [1], [0, 0, 1, 1], [], []>} : vector<8x16xbf16>, vector<16x32xbf16>, vector<8x32xf32> -> vector<8x32xf32>
    %c0_3 = arith.constant 0 : index
    %c0_4 = arith.constant 0 : index
    %4 = vector.load %arg3[%c0_3, %c0_4] : memref<1x32xf32, #tpu.memory_space<vmem>>, vector<1x32xf32>
    %5 = vector.broadcast %4 : vector<1x32xf32> to vector<8x32xf32>
    %6 = arith.addf %3, %5 : vector<8x32xf32>
    %cst_5 = arith.constant 0.000000e+00 : f32
    %7 = vector.broadcast %cst_5 : f32 to vector<8x32xf32>
    %8 = arith.maximumf %6, %7 : vector<8x32xf32>
    %9 = arith.truncf %8 : vector<8x32xf32> to vector<8x32xbf16>
    %c0_6 = arith.constant 0 : index
    %c0_7 = arith.constant 0 : index
    %10 = vector.load %arg4[%c0_6, %c0_7] : memref<32x32xbf16, #tpu.memory_space<vmem>>, vector<32x32xbf16>
    %cst_8 = arith.constant dense<0.000000e+00> : vector<8x32xf32>
    %11 = tpu.matmul %9, %10, %cst_8 {dimension_numbers = #tpu.dot_dimension_numbers<[1], [0], [0], [1], [0, 0, 1, 1], [], []>} : vector<8x32xbf16>, vector<32x32xbf16>, vector<8x32xf32> -> vector<8x32xf32>
    %c0_9 = arith.constant 0 : index
    %c0_10 = arith.constant 0 : index
    %12 = vector.load %arg5[%c0_9, %c0_10] : memref<1x32xf32, #tpu.memory_space<vmem>>, vector<1x32xf32>
    %13 = vector.broadcast %12 : vector<1x32xf32> to vector<8x32xf32>
    %14 = arith.addf %11, %13 : vector<8x32xf32>
    %cst_11 = arith.constant 0.000000e+00 : f32
    %15 = vector.broadcast %cst_11 : f32 to vector<8x32xf32>
    %16 = arith.maximumf %14, %15 : vector<8x32xf32>
    %17 = arith.truncf %16 : vector<8x32xf32> to vector<8x32xbf16>
    %c0_12 = arith.constant 0 : index
    %c0_13 = arith.constant 0 : index
    %18 = vector.load %arg6[%c0_12, %c0_13] : memref<32x32xbf16, #tpu.memory_space<vmem>>, vector<32x32xbf16>
    %cst_14 = arith.constant dense<0.000000e+00> : vector<8x32xf32>
    %19 = tpu.matmul %17, %18, %cst_14 {dimension_numbers = #tpu.dot_dimension_numbers<[1], [0], [0], [1], [0, 0, 1, 1], [], []>} : vector<8x32xbf16>, vector<32x32xbf16>, vector<8x32xf32> -> vector<8x32xf32>
    %c0_15 = arith.constant 0 : index
    %c0_16 = arith.constant 0 : index
    %20 = vector.load %arg7[%c0_15, %c0_16] : memref<1x32xf32, #tpu.memory_space<vmem>>, vector<1x32xf32>
    %21 = vector.broadcast %20 : vector<1x32xf32> to vector<8x32xf32>
    %22 = arith.addf %19, %21 : vector<8x32xf32>
    %cst_17 = arith.constant 0.000000e+00 : f32
    %23 = vector.broadcast %cst_17 : f32 to vector<8x32xf32>
    %24 = arith.maximumf %22, %23 : vector<8x32xf32>
    %25 = arith.truncf %24 : vector<8x32xf32> to vector<8x32xbf16>
    %c0_18 = arith.constant 0 : index
    %c0_19 = arith.constant 0 : index
    %26 = vector.load %arg8[%c0_18, %c0_19] : memref<32x32xbf16, #tpu.memory_space<vmem>>, vector<32x32xbf16>
    %cst_20 = arith.constant dense<0.000000e+00> : vector<8x32xf32>
    %27 = tpu.matmul %25, %26, %cst_20 {dimension_numbers = #tpu.dot_dimension_numbers<[1], [0], [0], [1], [0, 0, 1, 1], [], []>} : vector<8x32xbf16>, vector<32x32xbf16>, vector<8x32xf32> -> vector<8x32xf32>
    %c0_21 = arith.constant 0 : index
    %c0_22 = arith.constant 0 : index
    %28 = vector.load %arg9[%c0_21, %c0_22] : memref<1x32xf32, #tpu.memory_space<vmem>>, vector<1x32xf32>
    %29 = vector.broadcast %28 : vector<1x32xf32> to vector<8x32xf32>
    %30 = arith.addf %27, %29 : vector<8x32xf32>
    %cst_23 = arith.constant 0.000000e+00 : f32
    %31 = vector.broadcast %cst_23 : f32 to vector<8x32xf32>
    %32 = arith.maximumf %30, %31 : vector<8x32xf32>
    %33 = arith.truncf %32 : vector<8x32xf32> to vector<8x32xbf16>
    %c0_24 = arith.constant 0 : index
    %c0_25 = arith.constant 0 : index
    %34 = vector.load %arg10[%c0_24, %c0_25] : memref<32x128xbf16, #tpu.memory_space<vmem>>, vector<32x128xbf16>
    %cst_26 = arith.constant dense<0.000000e+00> : vector<8x128xf32>
    %35 = tpu.matmul %33, %34, %cst_26 {dimension_numbers = #tpu.dot_dimension_numbers<[1], [0], [0], [1], [0, 0, 1, 1], [], []>} : vector<8x32xbf16>, vector<32x128xbf16>, vector<8x128xf32> -> vector<8x128xf32>
    %c0_27 = arith.constant 0 : index
    %c0_28 = arith.constant 0 : index
    %36 = vector.load %arg11[%c0_27, %c0_28] : memref<1x128xf32, #tpu.memory_space<vmem>>, vector<1x128xf32>
    %37 = vector.broadcast %36 : vector<1x128xf32> to vector<8x128xf32>
    %38 = arith.addf %35, %37 : vector<8x128xf32>
    %39 = arith.truncf %38 : vector<8x128xf32> to vector<8x128xbf16>
    %c0_29 = arith.constant 0 : index
    %c0_30 = arith.constant 0 : index
    %40 = vector.load %arg12[%c0_29, %c0_30] : memref<8x128xbf16, #tpu.memory_space<vmem>>, vector<8x128xbf16>
    tpu.vector_store %arg12[%c0_29, %c0_30], %39 {strides = array<i32>} : memref<8x128xbf16, #tpu.memory_space<vmem>>, vector<8x128xbf16>,
    return
  }
  func.func @transform_0(%arg0: i32) -> (i32, i32) {
    %c0_i32 = arith.constant 0 : i32
    %c0_i32_0 = arith.constant 0 : i32
    return %arg0, %c0_i32 : i32, i32
  }
  func.func @transform_1(%arg0: i32) -> (i32, i32) {
    %c0_i32 = arith.constant 0 : i32
    %c0_i32_0 = arith.constant 0 : i32
    %c0_i32_1 = arith.constant 0 : i32
    return %c0_i32, %c0_i32_0 : i32, i32
  }
  func.func @transform_2(%arg0: i32) -> (i32, i32) {
    %c0_i32 = arith.constant 0 : i32
    %c0_i32_0 = arith.constant 0 : i32
    %c0_i32_1 = arith.constant 0 : i32
    return %c0_i32, %c0_i32_0 : i32, i32
  }
  func.func @transform_3(%arg0: i32) -> (i32, i32) {
    %c0_i32 = arith.constant 0 : i32
    %c0_i32_0 = arith.constant 0 : i32
    %c0_i32_1 = arith.constant 0 : i32
    return %c0_i32, %c0_i32_0 : i32, i32
  }
  func.func @transform_4(%arg0: i32) -> (i32, i32) {
    %c0_i32 = arith.constant 0 : i32
    %c0_i32_0 = arith.constant 0 : i32
    %c0_i32_1 = arith.constant 0 : i32
    return %c0_i32, %c0_i32_0 : i32, i32
  }
  func.func @transform_5(%arg0: i32) -> (i32, i32) {
    %c0_i32 = arith.constant 0 : i32
    %c0_i32_0 = arith.constant 0 : i32
    %c0_i32_1 = arith.constant 0 : i32
    return %c0_i32, %c0_i32_0 : i32, i32
  }
  func.func @transform_6(%arg0: i32) -> (i32, i32) {
    %c0_i32 = arith.constant 0 : i32
    %c0_i32_0 = arith.constant 0 : i32
    %c0_i32_1 = arith.constant 0 : i32
    return %c0_i32, %c0_i32_0 : i32, i32
  }
  func.func @transform_7(%arg0: i32) -> (i32, i32) {
    %c0_i32 = arith.constant 0 : i32
    %c0_i32_0 = arith.constant 0 : i32
    %c0_i32_1 = arith.constant 0 : i32
    return %c0_i32, %c0_i32_0 : i32, i32
  }
  func.func @transform_8(%arg0: i32) -> (i32, i32) {
    %c0_i32 = arith.constant 0 : i32
    %c0_i32_0 = arith.constant 0 : i32
    %c0_i32_1 = arith.constant 0 : i32
    return %c0_i32, %c0_i32_0 : i32, i32
  }
  func.func @transform_9(%arg0: i32) -> (i32, i32) {
    %c0_i32 = arith.constant 0 : i32
    %c0_i32_0 = arith.constant 0 : i32
    %c0_i32_1 = arith.constant 0 : i32
    return %c0_i32, %c0_i32_0 : i32, i32
  }
  func.func @transform_10(%arg0: i32) -> (i32, i32) {
    %c0_i32 = arith.constant 0 : i32
    %c0_i32_0 = arith.constant 0 : i32
    %c0_i32_1 = arith.constant 0 : i32
    return %c0_i32, %c0_i32_0 : i32, i32
  }
  func.func @transform_11(%arg0: i32) -> (i32, i32) {
    %c0_i32 = arith.constant 0 : i32
    %c0_i32_0 = arith.constant 0 : i32
    return %arg0, %c0_i32 : i32, i32
  }
}

</mosaic_0001>

<llo_original>
// kernel: tpu_custom_call.1
$region0: #{tpu_custom_call.1}
  #allocation0 [shape = 'u32[]', space=smem, size = 0x4, offset = 0x4, fixed_abs, tag = 'smem constant byte address 0x4 - core index']
  #allocation1 [shape = 'u32[144,128]{1,0:T(1,128)}', space=vmem, size = 0x12000, scoped, tag = 'internal scratch']
  %s0 = inlined_call_operand.hbm [shape: f32[8,16], index: 0, kind: input, shape index: {}]
  %s1 = inlined_call_operand.hbm [shape: bf16[16,32], index: 1, kind: input, shape index: {}]
  %s2 = inlined_call_operand.hbm [shape: f32[1,32], index: 2, kind: input, shape index: {}]
  %s3 = inlined_call_operand.hbm [shape: bf16[32,32], index: 3, kind: input, shape index: {}]
  %s4 = inlined_call_operand.hbm [shape: f32[1,32], index: 4, kind: input, shape index: {}]
  %s5 = inlined_call_operand.hbm [shape: bf16[32,32], index: 5, kind: input, shape index: {}]
  %s6 = inlined_call_operand.hbm [shape: f32[1,32], index: 6, kind: input, shape index: {}]
  %s7 = inlined_call_operand.hbm [shape: bf16[32,32], index: 7, kind: input, shape index: {}]
  %s8 = inlined_call_operand.hbm [shape: f32[1,32], index: 8, kind: input, shape index: {}]
  %s9 = inlined_call_operand.vmem [shape: bf16[32,128], index: 9, kind: input, shape index: {}]
  %s10 = inlined_call_operand.vmem [shape: f32[1,128], index: 10, kind: input, shape index: {}]
  %s11 = inlined_call_operand.hbm [shape: bf16[8,128], index: 11, kind: output, shape index: {}]
  %s12 = sld [smem:[#allocation0]]
  $region90: #{tpu_custom_call.1} parent=0
    _
  %s14 = ssub.s32 1, %s12
  %s15 = scalar_select 0, %s14, %s12
  $region1: #{tpu_custom_call.1} parent=0
    #allocation2 [shape = 'u8[4096]{0}', space=vmem, size = 0x1000, scoped, tag = 'input window, operand 0, single buffered']
    #allocation3 [shape = 's32[1]{0}', space=sflag, size = 0x4, scoped, tag = 'scoped memory for tpu_custom_call.1']
    #allocation4 [shape = 's32[1]{0}', space=sflag, size = 0x4, scoped, tag = 'scoped memory for tpu_custom_call.1']
    #allocation5 [shape = 'u8[4096]{0}', space=vmem, size = 0x1000, scoped, tag = 'input window, operand 1, single buffered']
    #allocation6 [shape = 's32[1]{0}', space=sflag, size = 0x4, scoped, tag = 'scoped memory for tpu_custom_call.1']
    #allocation7 [shape = 'u8[512]{0}', space=vmem, size = 0x400, scoped, tag = 'input window, operand 2, single buffered']
    #allocation8 [shape = 'u8[8192]{0}', space=vmem, size = 0x2000, scoped, tag = 'input window, operand 3, single buffered']
    #allocation9 [shape = 's32[1]{0}', space=sflag, size = 0x4, scoped, tag = 'scoped memory for tpu_custom_call.1']
    #allocation10 [shape = 'u8[512]{0}', space=vmem, size = 0x400, scoped, tag = 'input window, operand 4, single buffered']
    #allocation11 [shape = 'u8[8192]{0}', space=vmem, size = 0x2000, scoped, tag = 'input window, operand 5, single buffered']
    #allocation12 [shape = 's32[1]{0}', space=sflag, size = 0x4, scoped, tag = 'scoped memory for tpu_custom_call.1']
    #allocation13 [shape = 'u8[512]{0}', space=vmem, size = 0x400, scoped, tag = 'input window, operand 6, single buffered']
    #allocation14 [shape = 'u8[8192]{0}', space=vmem, size = 0x2000, scoped, tag = 'input window, operand 7, single buffered']
    #allocation15 [shape = 's32[1]{0}', space=sflag, size = 0x4, scoped, tag = 'scoped memory for tpu_custom_call.1']
    #allocation16 [shape = 'u8[512]{0}', space=vmem, size = 0x400, scoped, tag = 'input window, operand 8, single buffered']
    #allocation17 [shape = 'u8[2048]{0}', space=vmem, size = 0x800, scoped, tag = 'output window, operand 0, single buffered']
    %16 = vsyncpa [#allocation3], 0
    %17 = vsyncpa [#allocation6], 0
    %18 = vsyncpa [#allocation9], 0
    %19 = vsyncpa [#allocation12], 0
    %20 = vsyncpa [#allocation15], 0
    %21 = vsyncpa [#allocation4], 0
    // Predicated region
    $region2: #{tpu_custom_call.1} parent=1 // pred_check
      _
    $region3: #{tpu_custom_call.1} parent=1 // pred_check_branch
      %23 = sbr.rel (0) target = $region5
    $region4: #{tpu_custom_call.1} parent=1 // pred_region
      %s25 = ssub.s32 128, 128
      %26 = vsyncadd [#allocation3], %s25
      %s28 = sshll.u32 [#allocation2], 4
      %s29 = int_to_ptr.vmem [resolvable:$true] %s28
      %31 = dma.hbm_to_vmem [thread:$0]  %s0, 128, %s29, [#allocation3]
    $region5: #{tpu_custom_call.1} parent=1 // pred_fallthru
      _
    // Predicated region
    $region6: #{tpu_custom_call.1} parent=1 // pred_check
      _
    $region7: #{tpu_custom_call.1} parent=1 // pred_check_branch
      %33 = sbr.rel (0) target = $region9
    $region8: #{tpu_custom_call.1} parent=1 // pred_region
      %s35 = ssub.s32 128, 128
      %36 = vsyncadd [#allocation6], %s35
      %s37 = sshll.u32 [#allocation5], 4
      %s38 = int_to_ptr.vmem [resolvable:$true] %s37
      %43 = dma.hbm_to_vmem [thread:$0]  %s1, 128, %s38, [#allocation6], 64, 64, 4
    $region9: #{tpu_custom_call.1} parent=1 // pred_fallthru
      _
    // Predicated region
    $region10: #{tpu_custom_call.1} parent=1 // pred_check
      _
    $region11: #{tpu_custom_call.1} parent=1 // pred_check_branch
      %45 = sbr.rel (0) target = $region13
    $region12: #{tpu_custom_call.1} parent=1 // pred_region
      %s47 = ssub.s32 16, 16
      %48 = vsyncadd [#allocation6], %s47
      %s50 = sshll.u32 [#allocation7], 4
      %s51 = int_to_ptr.vmem [resolvable:$true] %s50
      %53 = dma.hbm_to_vmem [thread:$0]  %s2, 16, %s51, [#allocation6]
    $region13: #{tpu_custom_call.1} parent=1 // pred_fallthru
      _
    // Predicated region
    $region14: #{tpu_custom_call.1} parent=1 // pred_check
      _
    $region15: #{tpu_custom_call.1} parent=1 // pred_check_branch
      %55 = sbr.rel (0) target = $region17
    $region16: #{tpu_custom_call.1} parent=1 // pred_region
      %s57 = ssub.s32 256, 256
      %58 = vsyncadd [#allocation9], %s57
      %s59 = sshll.u32 [#allocation8], 4
      %s60 = int_to_ptr.vmem [resolvable:$true] %s59
      %65 = dma.hbm_to_vmem [thread:$0]  %s3, 256, %s60, [#allocation9], 64, 64, 4
    $region17: #{tpu_custom_call.1} parent=1 // pred_fallthru
      _
    // Predicated region
    $region18: #{tpu_custom_call.1} parent=1 // pred_check
      _
    $region19: #{tpu_custom_call.1} parent=1 // pred_check_branch
      %67 = sbr.rel (0) target = $region21
    $region20: #{tpu_custom_call.1} parent=1 // pred_region
      %s69 = ssub.s32 16, 16
      %70 = vsyncadd [#allocation9], %s69
      %s72 = sshll.u32 [#allocation10], 4
      %s73 = int_to_ptr.vmem [resolvable:$true] %s72
      %75 = dma.hbm_to_vmem [thread:$0]  %s4, 16, %s73, [#allocation9]
    $region21: #{tpu_custom_call.1} parent=1 // pred_fallthru
      _
    // Predicated region
    $region22: #{tpu_custom_call.1} parent=1 // pred_check
      _
    $region23: #{tpu_custom_call.1} parent=1 // pred_check_branch
      %77 = sbr.rel (0) target = $region25
    $region24: #{tpu_custom_call.1} parent=1 // pred_region
      %s79 = ssub.s32 256, 256
      %80 = vsyncadd [#allocation12], %s79
      %s81 = sshll.u32 [#allocation11], 4
      %s82 = int_to_ptr.vmem [resolvable:$true] %s81
      %87 = dma.hbm_to_vmem [thread:$0]  %s5, 256, %s82, [#allocation12], 64, 64, 4
    $region25: #{tpu_custom_call.1} parent=1 // pred_fallthru
      _
    // Predicated region
    $region26: #{tpu_custom_call.1} parent=1 // pred_check
      _
    $region27: #{tpu_custom_call.1} parent=1 // pred_check_branch
      %89 = sbr.rel (0) target = $region29
    $region28: #{tpu_custom_call.1} parent=1 // pred_region
      %s91 = ssub.s32 16, 16
      %92 = vsyncadd [#allocation12], %s91
      %s94 = sshll.u32 [#allocation13], 4
      %s95 = int_to_ptr.vmem [resolvable:$true] %s94
      %97 = dma.hbm_to_vmem [thread:$0]  %s6, 16, %s95, [#allocation12]
    $region29: #{tpu_custom_call.1} parent=1 // pred_fallthru
      _
    // Predicated region
    $region30: #{tpu_custom_call.1} parent=1 // pred_check
      _
    $region31: #{tpu_custom_call.1} parent=1 // pred_check_branch
      %99 = sbr.rel (0) target = $region33
    $region32: #{tpu_custom_call.1} parent=1 // pred_region
      %s101 = ssub.s32 256, 256
      %102 = vsyncadd [#allocation15], %s101
      %s103 = sshll.u32 [#allocation14], 4
      %s104 = int_to_ptr.vmem [resolvable:$true] %s103
      %109 = dma.hbm_to_vmem [thread:$0]  %s7, 256, %s104, [#allocation15], 64, 64, 4
    $region33: #{tpu_custom_call.1} parent=1 // pred_fallthru
      _
    // Predicated region
    $region34: #{tpu_custom_call.1} parent=1 // pred_check
      _
    $region35: #{tpu_custom_call.1} parent=1 // pred_check_branch
      %111 = sbr.rel (0) target = $region37
    $region36: #{tpu_custom_call.1} parent=1 // pred_region
      %s113 = ssub.s32 16, 16
      %114 = vsyncadd [#allocation15], %s113
      %s116 = sshll.u32 [#allocation16], 4
      %s117 = int_to_ptr.vmem [resolvable:$true] %s116
      %119 = dma.hbm_to_vmem [thread:$0]  %s8, 16, %s117, [#allocation15]
    $region37: #{tpu_custom_call.1} parent=1 // pred_fallthru
      _
    // Predicated region
    $region38: #{tpu_custom_call.1} parent=1 // pred_check
      _
    $region39: #{tpu_custom_call.1} parent=1 // pred_check_branch
      %121 = sbr.rel (0) target = $region41
    $region40: #{tpu_custom_call.1} parent=1 // pred_region
      _
    $region41: #{tpu_custom_call.1} parent=1 // pred_fallthru
      _
    // Predicated region
    $region42: #{tpu_custom_call.1} parent=1 // pred_check
      _
    $region43: #{tpu_custom_call.1} parent=1 // pred_check_branch
      %123 = sbr.rel (0) target = $region45
    $region44: #{tpu_custom_call.1} parent=1 // pred_region
      _
    $region45: #{tpu_custom_call.1} parent=1 // pred_fallthru
      _
    // Predicated region
    $region46: #{tpu_custom_call.1} parent=1 // pred_check
      _
    $region47: #{tpu_custom_call.1} parent=1 // pred_check_branch
      %125 = sbr.rel (0) target = $region49
    $region48: #{tpu_custom_call.1} parent=1 // pred_region
      %126 = dma.done [#allocation3], 128
    $region49: #{tpu_custom_call.1} parent=1 // pred_fallthru
      _
    // Predicated region
    $region50: #{tpu_custom_call.1} parent=1 // pred_check
      _
    $region51: #{tpu_custom_call.1} parent=1 // pred_check_branch
      %128 = sbr.rel (0) target = $region53
    $region52: #{tpu_custom_call.1} parent=1 // pred_region
      %129 = dma.done [#allocation6], 128
    $region53: #{tpu_custom_call.1} parent=1 // pred_fallthru
      _
    // Predicated region
    $region54: #{tpu_custom_call.1} parent=1 // pred_check
      _
    $region55: #{tpu_custom_call.1} parent=1 // pred_check_branch
      %131 = sbr.rel (0) target = $region57
    $region56: #{tpu_custom_call.1} parent=1 // pred_region
      %132 = dma.done [#allocation6], 16
    $region57: #{tpu_custom_call.1} parent=1 // pred_fallthru
      _
    // Predicated region
    $region58: #{tpu_custom_call.1} parent=1 // pred_check
      _
    $region59: #{tpu_custom_call.1} parent=1 // pred_check_branch
      %134 = sbr.rel (0) target = $region61
    $region60: #{tpu_custom_call.1} parent=1 // pred_region
      %135 = dma.done [#allocation9], 256
    $region61: #{tpu_custom_call.1} parent=1 // pred_fallthru
      _
    // Predicated region
    $region62: #{tpu_custom_call.1} parent=1 // pred_check
      _
    $region63: #{tpu_custom_call.1} parent=1 // pred_check_branch
      %137 = sbr.rel (0) target = $region65
    $region64: #{tpu_custom_call.1} parent=1 // pred_region
      %138 = dma.done [#allocation9], 16
    $region65: #{tpu_custom_call.1} parent=1 // pred_fallthru
      _
    // Predicated region
    $region66: #{tpu_custom_call.1} parent=1 // pred_check
      _
    $region67: #{tpu_custom_call.1} parent=1 // pred_check_branch
      %140 = sbr.rel (0) target = $region69
    $region68: #{tpu_custom_call.1} parent=1 // pred_region
      %141 = dma.done [#allocation12], 256
    $region69: #{tpu_custom_call.1} parent=1 // pred_fallthru
      _
    // Predicated region
    $region70: #{tpu_custom_call.1} parent=1 // pred_check
      _
    $region71: #{tpu_custom_call.1} parent=1 // pred_check_branch
      %143 = sbr.rel (0) target = $region73
    $region72: #{tpu_custom_call.1} parent=1 // pred_region
      %144 = dma.done [#allocation12], 16
    $region73: #{tpu_custom_call.1} parent=1 // pred_fallthru
      _
    // Predicated region
    $region74: #{tpu_custom_call.1} parent=1 // pred_check
      _
    $region75: #{tpu_custom_call.1} parent=1 // pred_check_branch
      %146 = sbr.rel (0) target = $region77
    $region76: #{tpu_custom_call.1} parent=1 // pred_region
      %147 = dma.done [#allocation15], 256
    $region77: #{tpu_custom_call.1} parent=1 // pred_fallthru
      _
    // Predicated region
    $region78: #{tpu_custom_call.1} parent=1 // pred_check
      _
    $region79: #{tpu_custom_call.1} parent=1 // pred_check_branch
      %149 = sbr.rel (0) target = $region81
    $region80: #{tpu_custom_call.1} parent=1 // pred_region
      %150 = dma.done [#allocation15], 16
    $region81: #{tpu_custom_call.1} parent=1 // pred_fallthru
      _
    %v152 = vld [vmem:[#allocation2] sm:$0xff]
    %v153 = vpack.c.bf16 %v152, %v152
    %v154 = vld [vmem:[#allocation5] sm:$0xf]
    %v155 = vld [vmem:[#allocation5 + $0x4] sm:$0xf]
    %v156 = vld [vmem:[#allocation7] sm:$0x1]
    %v158 = vlaneseq
    %v159 = vshrl.u32 %v158, 7
    %v160 = vsub.s32 0, %v159
    %v161 = vrot.slane %v156, %v160
    %v165 = vunpack.c.l.b16 %v154
    %v166 = vunpack.c.l.b16 %v155
    %v167 = vpack.c.b16 %v166, %v165
    %vm169 = vcmask 130048
    %v171 = vsel %vm169, %v153, 0
    %173 = vmatprep.subr.bf16.mxu0 0
    %174 = vmatpush1.bf16.msra.mxu0 0
    %175 = vmatprep.subr.bf16.mxu0 0
    %176 = vmatpush1.bf16.msra.mxu0 0
    %177 = vmatprep.subr.bf16.mxu0 0
    %178 = vmatpush1.bf16.msra.mxu0 0
    %179 = vmatprep.subr.bf16.mxu0 0
    %180 = vmatpush1.bf16.msra.mxu0 0
    %181 = vmatprep.subr.bf16.mxu0 0
    %182 = vmatpush1.bf16.msra.mxu0 0
    %183 = vmatprep.subr.bf16.mxu0 0
    %184 = vmatpush1.bf16.msra.mxu0 0
    %185 = vmatprep.subr.bf16.mxu0 0
    %186 = vmatpush1.bf16.msra.mxu0 0
    %187 = vmatprep.subr.bf16.mxu0 0
    %188 = vmatpush1.bf16.msra.mxu0 %v167
    %189 = vmatprep.subr.bf16.mxu0 0
    %190 = vmatpush2.bf16.msra.mxu0 0
    %191 = vmatprep.subr.bf16.mxu0 0
    %192 = vmatpush2.bf16.msra.mxu0 0
    %193 = vmatprep.subr.bf16.mxu0 0
    %194 = vmatpush2.bf16.msra.mxu0 0
    %195 = vmatprep.subr.bf16.mxu0 0
    %196 = vmatpush2.bf16.msra.mxu0 0
    %197 = vmatprep.subr.bf16.mxu0 0
    %198 = vmatpush2.bf16.msra.mxu0 0
    %199 = vmatprep.subr.bf16.mxu0 0
    %200 = vmatpush2.bf16.msra.mxu0 0
    %201 = vmatprep.subr.bf16.mxu0 0
    %202 = vmatpush2.bf16.msra.mxu0 0
    %203 = vmatprep.subr.bf16.mxu0 0
    %204 = vmatpush2.bf16.msra.mxu0 0
    %205 = vmatprep.mubr.bf16.mxu0 0
    %206 = vmatmul.mubr.bf16.gmra.mxu0 %v171
    %v207 = vpop.f32.mrf.mxu0
    %v208 = vadd.f32 %v161, %v207
    %v209 = vpop.f32.mrf.mxu0
    %v210 = vpop.f32.mrf.mxu0
    %v211 = vpop.f32.mrf.mxu0
    %212 = vdwg.mxu0
    %v213 = vmax.f32 %v208, 0.0
    %v214 = vpack.c.bf16 %v213, %v213
    %v215 = vld [vmem:[#allocation8] sm:$0xf]
    %v216 = vld [vmem:[#allocation8 + $0x4] sm:$0xf]
    %v217 = vld [vmem:[#allocation8 + $0x8] sm:$0xf]
    %v218 = vld [vmem:[#allocation8 + $0xc] sm:$0xf]
    %v219 = vld [vmem:[#allocation10] sm:$0x1]
    %v221 = vlaneseq
    %v222 = vshrl.u32 %v221, 7
    %v223 = vsub.s32 0, %v222
    %v224 = vrot.slane %v219, %v223
    %v230 = vunpack.c.l.b16 %v215
    %v231 = vunpack.c.l.b16 %v216
    %v232 = vunpack.c.l.b16 %v217
    %v233 = vunpack.c.l.b16 %v218
    %v234 = vpack.c.b16 %v231, %v230
    %v235 = vpack.c.b16 %v233, %v232
    %vm238 = vcmask 261120
    %v240 = vsel %vm238, %v214, 0
    %242 = vmatprep.subr.bf16.mxu0 0
    %243 = vmatpush1.bf16.msra.mxu0 0
    %244 = vmatprep.subr.bf16.mxu0 0
    %245 = vmatpush1.bf16.msra.mxu0 0
    %246 = vmatprep.subr.bf16.mxu0 0
    %247 = vmatpush1.bf16.msra.mxu0 0
    %248 = vmatprep.subr.bf16.mxu0 0
    %249 = vmatpush1.bf16.msra.mxu0 0
    %250 = vmatprep.subr.bf16.mxu0 0
    %251 = vmatpush1.bf16.msra.mxu0 0
    %252 = vmatprep.subr.bf16.mxu0 0
    %253 = vmatpush1.bf16.msra.mxu0 0
    %254 = vmatprep.subr.bf16.mxu0 0
    %255 = vmatpush1.bf16.msra.mxu0 %v235
    %256 = vmatprep.subr.bf16.mxu0 0
    %257 = vmatpush1.bf16.msra.mxu0 %v234
    %258 = vmatprep.subr.bf16.mxu0 0
    %259 = vmatpush2.bf16.msra.mxu0 0
    %260 = vmatprep.subr.bf16.mxu0 0
    %261 = vmatpush2.bf16.msra.mxu0 0
    %262 = vmatprep.subr.bf16.mxu0 0
    %263 = vmatpush2.bf16.msra.mxu0 0
    %264 = vmatprep.subr.bf16.mxu0 0
    %265 = vmatpush2.bf16.msra.mxu0 0
    %266 = vmatprep.subr.bf16.mxu0 0
    %267 = vmatpush2.bf16.msra.mxu0 0
    %268 = vmatprep.subr.bf16.mxu0 0
    %269 = vmatpush2.bf16.msra.mxu0 0
    %270 = vmatprep.subr.bf16.mxu0 0
    %271 = vmatpush2.bf16.msra.mxu0 0
    %272 = vmatprep.subr.bf16.mxu0 0
    %273 = vmatpush2.bf16.msra.mxu0 0
    %274 = vmatprep.mubr.bf16.mxu0 0
    %275 = vmatmul.mubr.bf16.gmra.mxu0 %v240
    %v276 = vpop.f32.mrf.mxu0
    %v277 = vadd.f32 %v224, %v276
    %v278 = vpop.f32.mrf.mxu0
    %v279 = vpop.f32.mrf.mxu0
    %v280 = vpop.f32.mrf.mxu0
    %281 = vdwg.mxu0
    %v282 = vmax.f32 %v277, 0.0
    %v283 = vpack.c.bf16 %v282, %v282
    %v284 = vld [vmem:[#allocation11] sm:$0xf]
    %v285 = vld [vmem:[#allocation11 + $0x4] sm:$0xf]
    %v286 = vld [vmem:[#allocation11 + $0x8] sm:$0xf]
    %v287 = vld [vmem:[#allocation11 + $0xc] sm:$0xf]
    %v288 = vld [vmem:[#allocation13] sm:$0x1]
    %v290 = vlaneseq
    %v291 = vshrl.u32 %v290, 7
    %v292 = vsub.s32 0, %v291
    %v293 = vrot.slane %v288, %v292
    %v299 = vunpack.c.l.b16 %v284
    %v300 = vunpack.c.l.b16 %v285
    %v301 = vunpack.c.l.b16 %v286
    %v302 = vunpack.c.l.b16 %v287
    %v303 = vpack.c.b16 %v300, %v299
    %v304 = vpack.c.b16 %v302, %v301
    %v308 = vsel %vm238, %v283, 0
    %310 = vmatprep.subr.bf16.mxu0 0
    %311 = vmatpush1.bf16.msra.mxu0 0
    %312 = vmatprep.subr.bf16.mxu0 0
    %313 = vmatpush1.bf16.msra.mxu0 0
    %314 = vmatprep.subr.bf16.mxu0 0
    %315 = vmatpush1.bf16.msra.mxu0 0
    %316 = vmatprep.subr.bf16.mxu0 0
    %317 = vmatpush1.bf16.msra.mxu0 0
    %318 = vmatprep.subr.bf16.mxu0 0
    %319 = vmatpush1.bf16.msra.mxu0 0
    %320 = vmatprep.subr.bf16.mxu0 0
    %321 = vmatpush1.bf16.msra.mxu0 0
    %322 = vmatprep.subr.bf16.mxu0 0
    %323 = vmatpush1.bf16.msra.mxu0 %v304
    %324 = vmatprep.subr.bf16.mxu0 0
    %325 = vmatpush1.bf16.msra.mxu0 %v303
    %326 = vmatprep.subr.bf16.mxu0 0
    %327 = vmatpush2.bf16.msra.mxu0 0
    %328 = vmatprep.subr.bf16.mxu0 0
    %329 = vmatpush2.bf16.msra.mxu0 0
    %330 = vmatprep.subr.bf16.mxu0 0
    %331 = vmatpush2.bf16.msra.mxu0 0
    %332 = vmatprep.subr.bf16.mxu0 0
    %333 = vmatpush2.bf16.msra.mxu0 0
    %334 = vmatprep.subr.bf16.mxu0 0
    %335 = vmatpush2.bf16.msra.mxu0 0
    %336 = vmatprep.subr.bf16.mxu0 0
    %337 = vmatpush2.bf16.msra.mxu0 0
    %338 = vmatprep.subr.bf16.mxu0 0
    %339 = vmatpush2.bf16.msra.mxu0 0
    %340 = vmatprep.subr.bf16.mxu0 0
    %341 = vmatpush2.bf16.msra.mxu0 0
    %342 = vmatprep.mubr.bf16.mxu0 0
    %343 = vmatmul.mubr.bf16.gmra.mxu0 %v308
    %v344 = vpop.f32.mrf.mxu0
    %v345 = vadd.f32 %v293, %v344
    %v346 = vpop.f32.mrf.mxu0
    %v347 = vpop.f32.mrf.mxu0
    %v348 = vpop.f32.mrf.mxu0
    %349 = vdwg.mxu0
    %v350 = vmax.f32 %v345, 0.0
    %v351 = vpack.c.bf16 %v350, %v350
    %v352 = vld [vmem:[#allocation14] sm:$0xf]
    %v353 = vld [vmem:[#allocation14 + $0x4] sm:$0xf]
    %v354 = vld [vmem:[#allocation14 + $0x8] sm:$0xf]
    %v355 = vld [vmem:[#allocation14 + $0xc] sm:$0xf]
    %v356 = vld [vmem:[#allocation16] sm:$0x1]
    %v358 = vlaneseq
    %v359 = vshrl.u32 %v358, 7
    %v360 = vsub.s32 0, %v359
    %v361 = vrot.slane %v356, %v360
    %v367 = vunpack.c.l.b16 %v352
    %v368 = vunpack.c.l.b16 %v353
    %v369 = vunpack.c.l.b16 %v354
    %v370 = vunpack.c.l.b16 %v355
    %v371 = vpack.c.b16 %v368, %v367
    %v372 = vpack.c.b16 %v370, %v369
    %v376 = vsel %vm238, %v351, 0
    %378 = vmatprep.subr.bf16.mxu0 0
    %379 = vmatpush1.bf16.msra.mxu0 0
    %380 = vmatprep.subr.bf16.mxu0 0
    %381 = vmatpush1.bf16.msra.mxu0 0
    %382 = vmatprep.subr.bf16.mxu0 0
    %383 = vmatpush1.bf16.msra.mxu0 0
    %384 = vmatprep.subr.bf16.mxu0 0
    %385 = vmatpush1.bf16.msra.mxu0 0
    %386 = vmatprep.subr.bf16.mxu0 0
    %387 = vmatpush1.bf16.msra.mxu0 0
    %388 = vmatprep.subr.bf16.mxu0 0
    %389 = vmatpush1.bf16.msra.mxu0 0
    %390 = vmatprep.subr.bf16.mxu0 0
    %391 = vmatpush1.bf16.msra.mxu0 %v372
    %392 = vmatprep.subr.bf16.mxu0 0
    %393 = vmatpush1.bf16.msra.mxu0 %v371
    %394 = vmatprep.subr.bf16.mxu0 0
    %395 = vmatpush2.bf16.msra.mxu0 0
    %396 = vmatprep.subr.bf16.mxu0 0
    %397 = vmatpush2.bf16.msra.mxu0 0
    %398 = vmatprep.subr.bf16.mxu0 0
    %399 = vmatpush2.bf16.msra.mxu0 0
    %400 = vmatprep.subr.bf16.mxu0 0
    %401 = vmatpush2.bf16.msra.mxu0 0
    %402 = vmatprep.subr.bf16.mxu0 0
    %403 = vmatpush2.bf16.msra.mxu0 0
    %404 = vmatprep.subr.bf16.mxu0 0
    %405 = vmatpush2.bf16.msra.mxu0 0
    %406 = vmatprep.subr.bf16.mxu0 0
    %407 = vmatpush2.bf16.msra.mxu0 0
    %408 = vmatprep.subr.bf16.mxu0 0
    %409 = vmatpush2.bf16.msra.mxu0 0
    %410 = vmatprep.mubr.bf16.mxu0 0
    %411 = vmatmul.mubr.bf16.gmra.mxu0 %v376
    %v412 = vpop.f32.mrf.mxu0
    %v413 = vadd.f32 %v361, %v412
    %v414 = vpop.f32.mrf.mxu0
    %v415 = vpop.f32.mrf.mxu0
    %v416 = vpop.f32.mrf.mxu0
    %417 = vdwg.mxu0
    %v418 = vmax.f32 %v413, 0.0
    %v419 = vpack.c.bf16 %v418, %v418
    %v420 = vld [vmem:[%s9] sm:$0xf]
    %v421 = vld [vmem:[%s9 + $0x4] sm:$0xf]
    %v422 = vld [vmem:[%s9 + $0x8] sm:$0xf]
    %v423 = vld [vmem:[%s9 + $0xc] sm:$0xf]
    %v424 = vld [vmem:[%s10] sm:$0x1]
    %v426 = vlaneseq
    %v427 = vshrl.u32 %v426, 7
    %v428 = vsub.s32 0, %v427
    %v429 = vrot.slane %v424, %v428
    %v435 = vunpack.c.l.b16 %v420
    %v436 = vunpack.c.l.b16 %v421
    %v437 = vunpack.c.l.b16 %v422
    %v438 = vunpack.c.l.b16 %v423
    %v439 = vpack.c.b16 %v436, %v435
    %v440 = vpack.c.b16 %v438, %v437
    %v444 = vsel %vm238, %v419, 0
    %446 = vmatprep.subr.bf16.mxu0 0
    %447 = vmatpush1.bf16.msra.mxu0 0
    %448 = vmatprep.subr.bf16.mxu0 0
    %449 = vmatpush1.bf16.msra.mxu0 0
    %450 = vmatprep.subr.bf16.mxu0 0
    %451 = vmatpush1.bf16.msra.mxu0 0
    %452 = vmatprep.subr.bf16.mxu0 0
    %453 = vmatpush1.bf16.msra.mxu0 0
    %454 = vmatprep.subr.bf16.mxu0 0
    %455 = vmatpush1.bf16.msra.mxu0 0
    %456 = vmatprep.subr.bf16.mxu0 0
    %457 = vmatpush1.bf16.msra.mxu0 0
    %458 = vmatprep.subr.bf16.mxu0 0
    %459 = vmatpush1.bf16.msra.mxu0 %v440
    %460 = vmatprep.subr.bf16.mxu0 0
    %461 = vmatpush1.bf16.msra.mxu0 %v439
    %462 = vmatprep.subr.bf16.mxu0 0
    %463 = vmatpush2.bf16.msra.mxu0 0
    %464 = vmatprep.subr.bf16.mxu0 0
    %465 = vmatpush2.bf16.msra.mxu0 0
    %466 = vmatprep.subr.bf16.mxu0 0
    %467 = vmatpush2.bf16.msra.mxu0 0
    %468 = vmatprep.subr.bf16.mxu0 0
    %469 = vmatpush2.bf16.msra.mxu0 0
    %470 = vmatprep.subr.bf16.mxu0 0
    %471 = vmatpush2.bf16.msra.mxu0 0
    %472 = vmatprep.subr.bf16.mxu0 0
    %473 = vmatpush2.bf16.msra.mxu0 0
    %474 = vmatprep.subr.bf16.mxu0 0
    %475 = vmatpush2.bf16.msra.mxu0 0
    %476 = vmatprep.subr.bf16.mxu0 0
    %477 = vmatpush2.bf16.msra.mxu0 0
    %478 = vmatprep.mubr.bf16.mxu0 0
    %479 = vmatmul.mubr.bf16.gmra.mxu0 %v444
    %v480 = vpop.f32.mrf.mxu0
    %v481 = vadd.f32 %v429, %v480
    %v482 = vpop.f32.mrf.mxu0
    %v483 = vpop.f32.mrf.mxu0
    %v484 = vpop.f32.mrf.mxu0
    %485 = vdwg.mxu0
    %v486 = vpack.c.bf16 %v481, %v481
    %487 = vst [vmem:[#allocation17] sm:$0xf] %v486
    // Predicated region
    $region82: #{tpu_custom_call.1} parent=1 // pred_check
      _
    $region83: #{tpu_custom_call.1} parent=1 // pred_check_branch
      %489 = sbr.rel (0) target = $region85
    $region84: #{tpu_custom_call.1} parent=1 // pred_region
      %s491 = ssub.s32 64, 64
      %492 = vsyncadd [#allocation4], %s491
      %s494 = sshll.u32 [#allocation17], 4
      %s495 = int_to_ptr.vmem [resolvable:$true] %s494
      %497 = dma.vmem_to_hbm [thread:$0]  %s495, 64, %s11, [#allocation4]
    $region85: #{tpu_custom_call.1} parent=1 // pred_fallthru
      _
    // Predicated region
    $region86: #{tpu_custom_call.1} parent=1 // pred_check
      _
    $region87: #{tpu_custom_call.1} parent=1 // pred_check_branch
      %499 = sbr.rel (0) target = $region89
    $region88: #{tpu_custom_call.1} parent=1 // pred_region
      %500 = dma.done [#allocation4], 64
    $region89: #{tpu_custom_call.1} parent=1 // pred_fallthru
      _
    %501 = vsyncpa [#allocation3], 1
    %502 = vsyncpa [#allocation6], 1
    %503 = vsyncpa [#allocation9], 1
    %504 = vsyncpa [#allocation12], 1
    %505 = vsyncpa [#allocation15], 1
    %506 = vsyncpa [#allocation4], 1

</llo_original>
